<compile_context>
chip_gen: v6e
topology: v6e:2x2x1
jax: 0.10.0
libtpu: 0.0.40
codegen_flags: <defaults>
</compile_context>

<pallas_src>
import numpy as np
import jax
import jax.numpy as jnp
from jax.experimental import pallas as pl
from jax.experimental.pallas import tpu as pltpu


_LANE = 128                               # TPU vreg lane width
_TILE_BUDGET_BYTES = 4 * 1024 * 1024      # ~4 MiB/tile -> ~16 MiB working set
_VMEM_LIMIT_BYTES = 32 * 1024 * 1024      # safe on v5e/v6e (128 MiB) & v7x (64 MiB)


def _copy_kernel(x_ref, o_ref):
    # Pure tile copy: the wrapper presents a lane/sublane-dense 2-D slab, so
    # this lowers to aligned vector loads/stores with no in-kernel relayout.
    o_ref[...] = x_ref[...]


def _sublane_packing(itemsize: int) -> int:
    # Native packed vreg tile height: f32 -> 8, bf16/f16 -> 16, int8/fp8 -> 32.
    return {4: 8, 2: 16, 1: 32}.get(itemsize, 8)


def _choose_slab(total: int):
    """Return (rows, lane, pad) with (total + pad) == rows * lane, lane % 128 == 0."""
    for lane in (16384, 8192, 4096, 2048, 1024, 512, 256, 128):
        if total % lane == 0:
            return total // lane, lane, 0
    # Total not a multiple of 128: pad up to the next multiple of 128 in the
    # wrapper (sliced off afterwards) instead of staging a (1, total) block.
    rows = -(-total // _LANE)
    return rows, _LANE, rows * _LANE - total


def _choose_block_rows(rows: int, lane: int, itemsize: int) -> int:
    """Row tile sized by bytes (~4 MiB), stepped at the dtype packing multiple."""
    packing = _sublane_packing(itemsize)
    # Whole slab fits in one budget-sized block, or slab is shorter than one
    # packed tile: a block equal to the full array dims is always legal.
    if rows * lane * itemsize <= _TILE_BUDGET_BYTES or rows <= packing:
        return rows
    target = _TILE_BUDGET_BYTES // (lane * itemsize)
    block_rows = max(packing, (target // packing) * packing)
    return min(block_rows, (rows // packing) * packing)


def flatten_pallas(x: jax.Array, full: bool = False, donate: bool = False) -> jax.Array:
    """Pallas equivalent of Flatten(full).forward(x)."""
    n = x.shape[0]
    total = int(np.prod(x.shape))
    itemsize = jnp.dtype(x.dtype).itemsize

    # 1) Wrapper-side collapse to a lane/sublane-dense slab (metadata, plus a
    #    small pad only when total is not a multiple of 128).
    rows, lane, pad = _choose_slab(total)
    flat = x.reshape(-1)
    if pad:
        flat = jnp.pad(flat, (0, pad))
    x2d = flat.reshape(rows, lane)

    # 2) Tiled identity copy with BlockSpec auto double-buffering.  Ragged
    #    row counts are handled by a cdiv grid with a clipped last block.
    block_rows = _choose_block_rows(rows, lane, itemsize)
    grid = (pl.cdiv(rows, block_rows),)

    out2d = pl.pallas_call(
        _copy_kernel,
        out_shape=jax.ShapeDtypeStruct((rows, lane), x.dtype),
        grid=grid,
        in_specs=[pl.BlockSpec((block_rows, lane), lambda i: (i, 0))],
        out_specs=pl.BlockSpec((block_rows, lane), lambda i: (i, 0)),
        compiler_params=pltpu.CompilerParams(
            dimension_semantics=("parallel",),
            vmem_limit_bytes=_VMEM_LIMIT_BYTES),
        cost_estimate=pl.CostEstimate(
            flops=0, transcendentals=0,
            bytes_accessed=2 * rows * lane * itemsize),
        input_output_aliases=({0: 0} if donate else {}),
    )(x2d)

    # 3) Wrapper-side (metadata-only) reshape back to the PyTorch output shape.
    out_flat = out2d.reshape(-1)
    if pad:
        out_flat = out_flat[:total]
    return out_flat if full else out_flat.reshape(n, total // n)


if __name__ == "__main__":
    key = jax.random.PRNGKey(0)
    # Small NCHW input consistent with a conv-net feature map.
    x = jax.random.normal(key, (2, 4, 16, 16), dtype=jnp.float32)

    # full=False: (N, C*H*W)
    y = flatten_pallas(x, full=False)
    jax.block_until_ready(y)
    ref = np.asarray(x).reshape(x.shape[0], -1)
    assert y.shape == ref.shape, (y.shape, ref.shape)
    np.testing.assert_array_equal(np.asarray(y), ref)

    # full=True: (N*C*H*W,)
    y_full = flatten_pallas(x, full=True)
    jax.block_until_ready(y_full)
    ref_full = np.asarray(x).reshape(-1)
    assert y_full.shape == ref_full.shape, (y_full.shape, ref_full.shape)
    np.testing.assert_array_equal(np.asarray(y_full), ref_full)

    # Aliased (donated) path: output shares the input HBM buffer.
    y_alias = flatten_pallas(x, full=False, donate=True)
    jax.block_until_ready(y_alias)
    np.testing.assert_array_equal(np.asarray(y_alias), ref)

    # Odd-sized input (total = 210, not a multiple of 128) exercising the
    # pad-to-(rows,128) path instead of the old whole-array-block fallback.
    x_odd = jax.random.normal(jax.random.PRNGKey(0), (2, 3, 5, 7), dtype=jnp.float32)
    y_odd = flatten_pallas(x_odd, full=False)
    jax.block_until_ready(y_odd)
    np.testing.assert_array_equal(
        np.asarray(y_odd), np.asarray(x_odd).reshape(x_odd.shape[0], -1))

    print("KERNEL_OK")
</pallas_src>

<mosaic_0001>
module attributes {stable_mosaic.version = 11 : i64} {
  func.func @_copy_kernel(%arg0: i32, %arg1: memref<1x2048xf32, #tpu.memory_space<vmem>>, %arg2: memref<1x2048xf32, #tpu.memory_space<vmem>>) attributes {dimension_semantics = [#tpu.dimension_semantics<parallel>], iteration_bounds = array<i64: 1>, scalar_prefetch = 0 : i64, scratch_operands = 0 : i64, tpu.core_type = #tpu.core_type<tc>, window_params = [{transform_indices = @transform_0, window_bounds = array<i64: 1, 2048>}, {transform_indices = @transform_1, window_bounds = array<i64: 1, 2048>}]} {
    %c0 = arith.constant 0 : index
    %c0_0 = arith.constant 0 : index
    %0 = vector.load %arg1[%c0, %c0_0] : memref<1x2048xf32, #tpu.memory_space<vmem>>, vector<1x2048xf32>
    %c0_1 = arith.constant 0 : index
    %c0_2 = arith.constant 0 : index
    %1 = vector.load %arg2[%c0_1, %c0_2] : memref<1x2048xf32, #tpu.memory_space<vmem>>, vector<1x2048xf32>
    tpu.vector_store %arg2[%c0_1, %c0_2], %0 {strides = array<i32>} : memref<1x2048xf32, #tpu.memory_space<vmem>>, vector<1x2048xf32>,
    return
  }
  func.func @transform_0(%arg0: i32) -> (i32, i32) {
    %c0_i32 = arith.constant 0 : i32
    %c0_i32_0 = arith.constant 0 : i32
    return %arg0, %c0_i32 : i32, i32
  }
  func.func @transform_1(%arg0: i32) -> (i32, i32) {
    %c0_i32 = arith.constant 0 : i32
    %c0_i32_0 = arith.constant 0 : i32
    return %arg0, %c0_i32 : i32, i32
  }
}

</mosaic_0001>

<llo_original>
// kernel: tpu_custom_call.1
$region0: #{tpu_custom_call.1}
  #allocation0 [shape = 'u32[]', space=smem, size = 0x4, offset = 0x4, fixed_abs, tag = 'smem constant byte address 0x4 - core index']
  #allocation1 [shape = 'u32[144,128]{1,0:T(1,128)}', space=vmem, size = 0x12000, scoped, tag = 'internal scratch']
  %s0 = inlined_call_operand.hbm [shape: f32[1,2048], index: 0, kind: input, shape index: {}]
  %s1 = inlined_call_operand.hbm [shape: f32[1,2048], index: 1, kind: output, shape index: {}]
  %s2 = sld [smem:[#allocation0]]
  $region18: #{tpu_custom_call.1} parent=0
    _
  %s4 = ssub.s32 1, %s2
  %s5 = scalar_select 0, %s4, %s2
  $region1: #{tpu_custom_call.1} parent=0
    #allocation2 [shape = 'u8[8192]{0}', space=vmem, size = 0x2000, scoped, tag = 'input window, operand 0, single buffered']
    #allocation3 [shape = 's32[1]{0}', space=sflag, size = 0x4, scoped, tag = 'scoped memory for tpu_custom_call.1']
    #allocation4 [shape = 's32[1]{0}', space=sflag, size = 0x4, scoped, tag = 'scoped memory for tpu_custom_call.1']
    #allocation5 [shape = 'u8[8192]{0}', space=vmem, size = 0x2000, scoped, tag = 'output window, operand 0, single buffered']
    %6 = vsyncpa [#allocation3], 0
    %7 = vsyncpa [#allocation4], 0
    // Predicated region
    $region2: #{tpu_custom_call.1} parent=1 // pred_check
      _
    $region3: #{tpu_custom_call.1} parent=1 // pred_check_branch
      %9 = sbr.rel (0) target = $region5
    $region4: #{tpu_custom_call.1} parent=1 // pred_region
      %s11 = ssub.s32 256, 256
      %12 = vsyncadd [#allocation3], %s11
      %s14 = sshll.u32 [#allocation2], 4
      %s15 = int_to_ptr.vmem [resolvable:$true] %s14
      %17 = dma.hbm_to_vmem [thread:$0]  %s0, 256, %s15, [#allocation3]
    $region5: #{tpu_custom_call.1} parent=1 // pred_fallthru
      _
    // Predicated region
    $region6: #{tpu_custom_call.1} parent=1 // pred_check
      _
    $region7: #{tpu_custom_call.1} parent=1 // pred_check_branch
      %19 = sbr.rel (0) target = $region9
    $region8: #{tpu_custom_call.1} parent=1 // pred_region
      %20 = dma.done [#allocation3], 256
    $region9: #{tpu_custom_call.1} parent=1 // pred_fallthru
      _
    %v21 = vld [vmem:[#allocation2] sm:$0xff]
    %v22 = vld [vmem:[#allocation2 + $0x8] sm:$0xff]
    %23 = vst [vmem:[#allocation5] sm:$0xff] %v21
    %24 = vst [vmem:[#allocation5 + $0x8] sm:$0xff] %v22
    // Predicated region
    $region10: #{tpu_custom_call.1} parent=1 // pred_check
      _
    $region11: #{tpu_custom_call.1} parent=1 // pred_check_branch
      %26 = sbr.rel (0) target = $region13
    $region12: #{tpu_custom_call.1} parent=1 // pred_region
      %s28 = ssub.s32 256, 256
      %29 = vsyncadd [#allocation4], %s28
      %s31 = sshll.u32 [#allocation5], 4
      %s32 = int_to_ptr.vmem [resolvable:$true] %s31
      %34 = dma.vmem_to_hbm [thread:$0]  %s32, 256, %s1, [#allocation4]
    $region13: #{tpu_custom_call.1} parent=1 // pred_fallthru
      _
    // Predicated region
    $region14: #{tpu_custom_call.1} parent=1 // pred_check
      _
    $region15: #{tpu_custom_call.1} parent=1 // pred_check_branch
      %36 = sbr.rel (0) target = $region17
    $region16: #{tpu_custom_call.1} parent=1 // pred_region
      %37 = dma.done [#allocation4], 256
    $region17: #{tpu_custom_call.1} parent=1 // pred_fallthru
      _
    %38 = vsyncpa [#allocation3], 1
    %39 = vsyncpa [#allocation4], 1

</llo_original>
